<compile_context>
chip_gen: v5e
topology: v5e:2x2
jax: 0.10.0
libtpu: 0.0.40
codegen_flags: <defaults>
</compile_context>

<pallas_src>
import math

import jax
import jax.numpy as jnp
from jax.experimental import pallas as pl
from jax.experimental.pallas import tpu as pltpu


# ----------------------------------------------------------------------------
# Parameter setup (glue, matches nn.Module.__init__ / reset_parameters)
# ----------------------------------------------------------------------------
def init_groupwise_linear_params(key, num_class: int, hidden_dim: int, bias: bool = True):
    """uniform(-stdv, stdv) init with stdv = 1/sqrt(hidden_dim), like PyTorch."""
    # TODO(synk): PyTorch's uniform_ RNG stream cannot be bit-reproduced; only
    # the distribution is matched here.
    stdv = 1.0 / math.sqrt(hidden_dim)
    kw, kb = jax.random.split(key)
    W = jax.random.uniform(kw, (1, num_class, hidden_dim),
                           minval=-stdv, maxval=stdv, dtype=jnp.float32)
    b = None
    if bias:
        b = jax.random.uniform(kb, (1, num_class),
                               minval=-stdv, maxval=stdv, dtype=jnp.float32)
    return W, b


# ----------------------------------------------------------------------------
# Pallas kernels (grid = (batch tiles, hidden-dim tiles); f32 accumulator)
# ----------------------------------------------------------------------------
def _gwl_bias_kernel(x_ref, w_ref, b_ref, o_ref, acc_ref):
    # x_ref: (TB, C, TD)  w_ref: (C, TD)  b_ref: (1, C)  o_ref: (TB, C)  acc: (TB, C) f32
    d = pl.program_id(1)

    @pl.when(d == 0)
    def _():
        acc_ref[...] = jnp.zeros_like(acc_ref)

    # multiply in the native dtype, accumulate the lane reduction in f32
    acc_ref[...] += jnp.sum(x_ref[...] * w_ref[...], axis=-1, dtype=jnp.float32)

    @pl.when(d == pl.num_programs(1) - 1)
    def _():
        o_ref[...] = (acc_ref[...] + b_ref[...].astype(jnp.float32)).astype(o_ref.dtype)


def _gwl_nobias_kernel(x_ref, w_ref, o_ref, acc_ref):
    d = pl.program_id(1)

    @pl.when(d == 0)
    def _():
        acc_ref[...] = jnp.zeros_like(acc_ref)

    acc_ref[...] += jnp.sum(x_ref[...] * w_ref[...], axis=-1, dtype=jnp.float32)

    @pl.when(d == pl.num_programs(1) - 1)
    def _():
        o_ref[...] = acc_ref[...].astype(o_ref.dtype)


# ----------------------------------------------------------------------------
# Generation-aware tiling heuristics
# ----------------------------------------------------------------------------
def _tpu_generation_budgets():
    """Return (target_block_bytes for the x tile, vmem_limit_bytes)."""
    kind = ""
    try:
        kind = jax.devices()[0].device_kind.lower()
    except Exception:
        pass
    mib = 1024 * 1024
    if "v5 lite" in kind or "v5e" in kind or "v5lite" in kind:
        # ~820 GB/s HBM: step overhead already small at 4-6 MiB; keep scoped
        # limit explicit so we never silently exceed the 16 MiB default.
        return 5 * mib, 32 * mib
    if "v6" in kind:
        # ~1.4 TB/s HBM: 8-12 MiB tiles push toward ~95% of roofline.
        return 10 * mib, 64 * mib
    if "v7" in kind or "7x" in kind:
        # ~3.2 TB/s HBM but only 64 MiB physical VMEM per TC: 12-16 MiB tiles,
        # double-buffered, under a ~48 MiB scoped limit.
        return 14 * mib, 48 * mib
    return 8 * mib, 32 * mib


def _choose_tiling(B, C, D, x_itemsize, out_itemsize, target_block_bytes, vmem_limit_bytes):
    """Pick (tb, td): batch tile and hidden-dim tile."""
    # dtype-dependent sublane multiple of the (tb, C) output block:
    # 8 for 4-byte, 16 for 2-byte, 32 for 1-byte dtypes.
    sublane = 8 * max(1, 4 // max(1, out_itemsize))

    # --- hidden-dim (reduction) tiling ------------------------------------
    # Only split D when a minimal (sublane-tall) whole-row tile is already
    # above target AND D splits cleanly into multiples of 128 (a ragged D tile
    # would feed garbage padding into the accumulator).
    td = D
    if C * D * x_itemsize * sublane > target_block_bytes and D % 128 == 0:
        cand = (target_block_bytes // max(1, C * x_itemsize * sublane)) // 128 * 128
        cand = max(128, min(cand, D))
        while cand > 128 and D % cand != 0:
            cand -= 128
        if D % cand == 0:
            td = cand
    kd = D // td

    # --- batch tiling -------------------------------------------------------
    tile_row_bytes = C * td * x_itemsize
    tb = max(sublane, (target_block_bytes // max(1, tile_row_bytes)) // sublane * sublane)

    # Guarantee >= 2 grid steps along the (parallel) batch axis when B allows:
    # cap at ceil(B/2) rounded up to the sublane multiple.
    if B > sublane:
        half = -(-B // 2)
        half = -(-half // sublane) * sublane
        tb = min(tb, half)

    if tb >= B:
        tb = B

    # Clamp by the actual double-buffered VMEM footprint.
    def footprint(tbv):
        x_buf = 2 * tbv * C * td * x_itemsize       # x, double-buffered
        w_buf = 2 * C * td * x_itemsize             # W (conservatively 2x)
        b_buf = 2 * C * 4                           # bias
        o_buf = 2 * tbv * C * out_itemsize          # output
        acc = tbv * C * 4                           # f32 accumulator scratch
        return x_buf + w_buf + b_buf + o_buf + acc

    budget = int(vmem_limit_bytes * 0.9)
    while tb > sublane and footprint(tb) > budget:
        tb = max(sublane, ((tb - 1) // sublane) * sublane)
    if tb > B:
        tb = B

    return tb, td, kd


# ----------------------------------------------------------------------------
# Wrapper
# ----------------------------------------------------------------------------
def groupwise_linear_forward(x, W, b=None):
    """Equivalent of GroupWiseLinear.forward.

    x: [B, C, D]; W: [1, C, D] or [C, D]; b: [1, C] / [C] / None.
    Returns [B, C].
    """
    B, C, D = x.shape
    W2 = jnp.asarray(W).reshape(C, D).astype(x.dtype)

    target_block_bytes, vmem_limit_bytes = _tpu_generation_budgets()
    out_itemsize = x.dtype.itemsize
    tb, td, kd = _choose_tiling(B, C, D, x.dtype.itemsize, out_itemsize,
                                target_block_bytes, vmem_limit_bytes)
    grid = (pl.cdiv(B, tb), kd)

    out_shape = jax.ShapeDtypeStruct((B, C), x.dtype)
    compiler_params = pltpu.CompilerParams(
        dimension_semantics=("parallel", "arbitrary"),
        vmem_limit_bytes=vmem_limit_bytes,
    )

    x_spec = pl.BlockSpec((tb, C, td), lambda i, d: (i, 0, d))
    w_spec = pl.BlockSpec((C, td), lambda i, d: (0, d))       # VMEM-resident per d-slab
    o_spec = pl.BlockSpec((tb, C), lambda i, d: (i, 0))       # revisited across d
    scratch = [pltpu.VMEM((tb, C), jnp.float32)]

    bias_bytes = (C * 4) if b is not None else 0
    cost = pl.CostEstimate(
        flops=2 * B * C * D,
        transcendentals=0,
        bytes_accessed=x.size * x.dtype.itemsize + C * D * x.dtype.itemsize
        + bias_bytes + B * C * out_itemsize,
    )

    if b is not None:
        b2 = jnp.asarray(b).reshape(1, C).astype(jnp.float32)
        return pl.pallas_call(
            _gwl_bias_kernel,
            out_shape=out_shape,
            grid_spec=pltpu.PrefetchScalarGridSpec(
                num_scalar_prefetch=0,
                grid=grid,
                in_specs=[
                    x_spec,
                    w_spec,
                    pl.BlockSpec((1, C), lambda i, d: (0, 0)),  # bias resident
                ],
                out_specs=o_spec,
                scratch_shapes=scratch,
            ),
            compiler_params=compiler_params,
            cost_estimate=cost,
        )(x, W2, b2)

    return pl.pallas_call(
        _gwl_nobias_kernel,
        out_shape=out_shape,
        grid_spec=pltpu.PrefetchScalarGridSpec(
            num_scalar_prefetch=0,
            grid=grid,
            in_specs=[x_spec, w_spec],
            out_specs=o_spec,
            scratch_shapes=scratch,
        ),
        compiler_params=compiler_params,
        cost_estimate=cost,
    )(x, W2)


# ----------------------------------------------------------------------------
# Main
# ----------------------------------------------------------------------------
if __name__ == "__main__":
    B, num_class, hidden_dim = 2, 4, 32

    key = jax.random.PRNGKey(0)
    kx, kp = jax.random.split(key)
    x = jax.random.normal(kx, (B, num_class, hidden_dim), dtype=jnp.float32)
    W, bias = init_groupwise_linear_params(kp, num_class, hidden_dim, bias=True)

    # Kernel forward (with bias).
    out = groupwise_linear_forward(x, W, bias)
    out = jax.block_until_ready(out)

    # Pure-JAX reference: (W * x).sum(-1) + b
    ref = jnp.sum(W * x, axis=-1) + bias
    assert out.shape == (B, num_class), out.shape
    assert jnp.allclose(out, ref, atol=1e-5, rtol=1e-5), "mismatch vs reference (bias)"

    # Also exercise the bias=False path once.
    out_nb = jax.block_until_ready(groupwise_linear_forward(x, W, None))
    ref_nb = jnp.sum(W * x, axis=-1)
    assert jnp.allclose(out_nb, ref_nb, atol=1e-5, rtol=1e-5), "mismatch vs reference (no bias)"

    print("KERNEL_OK")
</pallas_src>

<mosaic_0001>
module attributes {stable_mosaic.version = 11 : i64} {
  func.func @_gwl_bias_kernel(%arg0: i32, %arg1: i32, %arg2: memref<2x4x32xf32, #tpu.memory_space<vmem>>, %arg3: memref<4x32xf32, #tpu.memory_space<vmem>>, %arg4: memref<1x4xf32, #tpu.memory_space<vmem>>, %arg5: memref<2x4xf32, #tpu.memory_space<vmem>>, %arg6: memref<2x4xf32, #tpu.memory_space<vmem>>) attributes {dimension_semantics = [#tpu.dimension_semantics<parallel>, #tpu.dimension_semantics<arbitrary>], iteration_bounds = array<i64: 1, 1>, scalar_prefetch = 0 : i64, scratch_operands = 1 : i64, tpu.core_type = #tpu.core_type<tc>, window_params = [{transform_indices = @transform_0, window_bounds = array<i64: 2, 4, 32>}, {transform_indices = @transform_1, window_bounds = array<i64: 4, 32>}, {pipeline_mode = #tpu.pipeline_mode<synchronous>, transform_indices = @transform_2, window_bounds = array<i64: 1, 4>}, {transform_indices = @transform_3, window_bounds = array<i64: 2, 4>}]} {
    %c0_i32 = arith.constant 0 : i32
    %0 = arith.cmpi eq, %arg1, %c0_i32 : i32
    %1 = arith.extui %0 : i1 to i32
    %c0_i32_0 = arith.constant 0 : i32
    %2 = arith.cmpi ne, %1, %c0_i32_0 : i32
    scf.if %2 {
      %cst_11 = arith.constant 0.000000e+00 : f32
      %15 = vector.broadcast %cst_11 : f32 to vector<2x4xf32>
      %c0_12 = arith.constant 0 : index
      %c0_13 = arith.constant 0 : index
      %16 = vector.load %arg6[%c0_12, %c0_13] : memref<2x4xf32, #tpu.memory_space<vmem>>, vector<2x4xf32>
      tpu.vector_store %arg6[%c0_12, %c0_13], %15 {strides = array<i32>} : memref<2x4xf32, #tpu.memory_space<vmem>>, vector<2x4xf32>,
    } else {
    }
    %c0 = arith.constant 0 : index
    %c0_1 = arith.constant 0 : index
    %3 = vector.load %arg6[%c0, %c0_1] : memref<2x4xf32, #tpu.memory_space<vmem>>, vector<2x4xf32>
    %c0_2 = arith.constant 0 : index
    %c0_3 = arith.constant 0 : index
    %c0_4 = arith.constant 0 : index
    %4 = vector.load %arg2[%c0_2, %c0_3, %c0_4] : memref<2x4x32xf32, #tpu.memory_space<vmem>>, vector<2x4x32xf32>
    %c0_5 = arith.constant 0 : index
    %c0_6 = arith.constant 0 : index
    %5 = vector.load %arg3[%c0_5, %c0_6] : memref<4x32xf32, #tpu.memory_space<vmem>>, vector<4x32xf32>
    %6 = vector.shape_cast %5 : vector<4x32xf32> to vector<1x4x32xf32>
    %7 = vector.broadcast %6 : vector<1x4x32xf32> to vector<2x4x32xf32>
    %8 = arith.mulf %4, %7 : vector<2x4x32xf32>
    %cst = arith.constant dense<0.000000e+00> : vector<2x4xf32>
    %9 = vector.multi_reduction <add>, %8, %cst [2] : vector<2x4x32xf32> to vector<2x4xf32>
    %10 = arith.addf %3, %9 : vector<2x4xf32>
    %c0_7 = arith.constant 0 : index
    %c0_8 = arith.constant 0 : index
    %11 = vector.load %arg6[%c0_7, %c0_8] : memref<2x4xf32, #tpu.memory_space<vmem>>, vector<2x4xf32>
    tpu.vector_store %arg6[%c0_7, %c0_8], %10 {strides = array<i32>} : memref<2x4xf32, #tpu.memory_space<vmem>>, vector<2x4xf32>,
    %c0_i32_9 = arith.constant 0 : i32
    %12 = arith.cmpi eq, %arg1, %c0_i32_9 : i32
    %13 = arith.extui %12 : i1 to i32
    %c0_i32_10 = arith.constant 0 : i32
    %14 = arith.cmpi ne, %13, %c0_i32_10 : i32
    scf.if %14 {
      %c0_11 = arith.constant 0 : index
      %c0_12 = arith.constant 0 : index
      %15 = vector.load %arg6[%c0_11, %c0_12] : memref<2x4xf32, #tpu.memory_space<vmem>>, vector<2x4xf32>
      %c0_13 = arith.constant 0 : index
      %c0_14 = arith.constant 0 : index
      %16 = vector.load %arg4[%c0_13, %c0_14] : memref<1x4xf32, #tpu.memory_space<vmem>>, vector<1x4xf32>
      %17 = vector.broadcast %16 : vector<1x4xf32> to vector<2x4xf32>
      %18 = arith.addf %15, %17 : vector<2x4xf32>
      %c0_15 = arith.constant 0 : index
      %c0_16 = arith.constant 0 : index
      %19 = vector.load %arg5[%c0_15, %c0_16] : memref<2x4xf32, #tpu.memory_space<vmem>>, vector<2x4xf32>
      tpu.vector_store %arg5[%c0_15, %c0_16], %18 {strides = array<i32>} : memref<2x4xf32, #tpu.memory_space<vmem>>, vector<2x4xf32>,
    } else {
    }
    return
  }
  func.func @transform_0(%arg0: i32, %arg1: i32) -> (i32, i32, i32) {
    %c0_i32 = arith.constant 0 : i32
    %c0_i32_0 = arith.constant 0 : i32
    return %arg0, %c0_i32, %arg1 : i32, i32, i32
  }
  func.func @transform_1(%arg0: i32, %arg1: i32) -> (i32, i32) {
    %c0_i32 = arith.constant 0 : i32
    %c0_i32_0 = arith.constant 0 : i32
    return %c0_i32, %arg1 : i32, i32
  }
  func.func @transform_2(%arg0: i32, %arg1: i32) -> (i32, i32) {
    %c0_i32 = arith.constant 0 : i32
    %c0_i32_0 = arith.constant 0 : i32
    %c0_i32_1 = arith.constant 0 : i32
    return %c0_i32, %c0_i32_0 : i32, i32
  }
  func.func @transform_3(%arg0: i32, %arg1: i32) -> (i32, i32) {
    %c0_i32 = arith.constant 0 : i32
    %c0_i32_0 = arith.constant 0 : i32
    return %arg0, %c0_i32 : i32, i32
  }
}

</mosaic_0001>

<llo_original>
// kernel: tpu_custom_call.1
$region0: #{tpu_custom_call.1}
  #allocation0 [shape = 'u32[]', space=smem, size = 0x4, offset = 0x4, fixed_abs, tag = 'smem constant byte address 0x4 - core index']
  #allocation1 [shape = 'u32[72,128]{1,0:T(1,128)}', space=vmem, size = 0x9000, scoped, tag = 'internal scratch']
  #allocation2 [shape = 'f32[2,4]{1,0:T(2,128)}', space=vmem, size = 0x400, scoped, tag = 'scratch operand']
  %s0 = inlined_call_operand.hbm [shape: f32[2,4,32], index: 0, kind: input, shape index: {}]
  %s1 = inlined_call_operand.hbm [shape: f32[4,32], index: 1, kind: input, shape index: {}]
  %s2 = inlined_call_operand.vmem [shape: f32[1,4], index: 2, kind: input, shape index: {}]
  %s3 = inlined_call_operand.hbm [shape: f32[2,4], index: 3, kind: output, shape index: {}]
  %s4 = sld [smem:[#allocation0]]
  $region38: #{tpu_custom_call.1} parent=0
    _
  %s6 = ssub.s32 1, %s4
  %s7 = scalar_select 0, %s6, %s4
  $region1: #{tpu_custom_call.1} parent=0
    #allocation3 [shape = 'u8[4096]{0}', space=vmem, size = 0x1000, scoped, tag = 'input window, operand 0, single buffered']
    #allocation4 [shape = 's32[1]{0}', space=sflag, size = 0x4, scoped, tag = 'scoped memory for tpu_custom_call.1']
    #allocation5 [shape = 's32[1]{0}', space=sflag, size = 0x4, scoped, tag = 'scoped memory for tpu_custom_call.1']
    #allocation6 [shape = 'u8[2048]{0}', space=vmem, size = 0x800, scoped, tag = 'input window, operand 1, single buffered']
    #allocation7 [shape = 's32[1]{0}', space=sflag, size = 0x4, scoped, tag = 'scoped memory for tpu_custom_call.1']
    #allocation8 [shape = 'u8[1024]{0}', space=vmem, size = 0x400, scoped, tag = 'output window, operand 0, single buffered']
    %8 = vsyncpa [#allocation4], 0
    %9 = vsyncpa [#allocation7], 0
    %10 = vsyncpa [#allocation5], 0
    // Predicated region
    $region2: #{tpu_custom_call.1} parent=1 // pred_check
      _
    $region3: #{tpu_custom_call.1} parent=1 // pred_check_branch
      %12 = sbr.rel (0) target = $region5
    $region4: #{tpu_custom_call.1} parent=1 // pred_region
      %14 = vsyncadd [#allocation4], 0
      %s15 = sshll.u32 %s0, 4
      %s16 = int_to_ptr.hbm [resolvable:$true] %s15
      %s17 = sshll.u32 [#allocation3], 4
      %s18 = int_to_ptr.vmem [resolvable:$true] %s17
      %23 = dma.hbm_to_vmem [thread:$0]  %s16, 128, %s18, [#allocation4], 64, 64, 4
    $region5: #{tpu_custom_call.1} parent=1 // pred_fallthru
      _
    // Predicated region
    $region6: #{tpu_custom_call.1} parent=1 // pred_check
      _
    $region7: #{tpu_custom_call.1} parent=1 // pred_check_branch
      %25 = sbr.rel (0) target = $region9
    $region8: #{tpu_custom_call.1} parent=1 // pred_region
      %27 = vsyncadd [#allocation7], 0
      %s29 = sshll.u32 %s1, 4
      %s30 = int_to_ptr.hbm [resolvable:$true] %s29
      %s31 = sshll.u32 [#allocation6], 4
      %s32 = int_to_ptr.vmem [resolvable:$true] %s31
      %34 = dma.hbm_to_vmem [thread:$0]  %s30, 64, %s32, [#allocation7]
    $region9: #{tpu_custom_call.1} parent=1 // pred_fallthru
      _
    // Predicated region
    $region10: #{tpu_custom_call.1} parent=1 // pred_check
      _
    $region11: #{tpu_custom_call.1} parent=1 // pred_check_branch
      %36 = sbr.rel (0) target = $region13
    $region12: #{tpu_custom_call.1} parent=1 // pred_region
      _
    $region13: #{tpu_custom_call.1} parent=1 // pred_fallthru
      _
    // Predicated region
    $region14: #{tpu_custom_call.1} parent=1 // pred_check
      _
    $region15: #{tpu_custom_call.1} parent=1 // pred_check_branch
      %38 = sbr.rel (0) target = $region17
    $region16: #{tpu_custom_call.1} parent=1 // pred_region
      %40 = dma.done [#allocation4], 128
    $region17: #{tpu_custom_call.1} parent=1 // pred_fallthru
      _
    // Predicated region
    $region18: #{tpu_custom_call.1} parent=1 // pred_check
      _
    $region19: #{tpu_custom_call.1} parent=1 // pred_check_branch
      %42 = sbr.rel (0) target = $region21
    $region20: #{tpu_custom_call.1} parent=1 // pred_region
      %44 = dma.done [#allocation7], 64
    $region21: #{tpu_custom_call.1} parent=1 // pred_fallthru
      _
    %p45 = scmp.eq.s32.totalorder 0, 0
    // Predicated region
    $region22: #{tpu_custom_call.1} parent=1 // pred_check
      %p46 = pneg %p45
    $region23: #{tpu_custom_call.1} parent=1 // pred_check_branch
      %48 = sbr.rel (%p46) target = $region25
    $region24: #{tpu_custom_call.1} parent=1 // pred_region
      %vm49 = vcmask 25600
      %50 = vst.msk [vmem:[#allocation2] sm:$0x3] %vm49, 0.0
    $region25: #{tpu_custom_call.1} parent=1 // pred_fallthru
      _
    %v51 = vld [vmem:[#allocation2] sm:$0x3]
    %v52 = vld [vmem:[#allocation3] sm:$0xf]
    %v53 = vld [vmem:[#allocation3 + $0x4] sm:$0xf]
    %v54 = vld [vmem:[#allocation6] sm:$0xf]
    %v55 = vmul.f32 %v52, %v54
    %v56 = vmul.f32 %v53, %v54
    %vm57 = vcmask 257024
    %v58 = vsel %vm57, %v55, 0.0
    %59 = vadd.xlane.f32.xlu0 %v58
    %v60 = vpop.xlane.xlu0 %59
    %v61 = vsel %vm57, %v56, 0.0
    %62 = vadd.xlane.f32.xlu0 %v61
    %v63 = vpop.xlane.xlu0 %62
    %v66 = vlaneseq
    %v67 = vand.u32 %v66, 127
    %v68 = vperm.slane %v60, %v67
    %v69 = vperm.slane %v63, %v67
    %vm70 = vcmask 1041409
    %v71 = vsel %vm70, %v69, %v68
    %v73 = vadd.f32 %v51, %v71
    %vm74 = vcmask 25600
    %75 = vst.msk [vmem:[#allocation2] sm:$0x3] %vm74, %v73
    // Predicated region
    $region26: #{tpu_custom_call.1} parent=1 // pred_check
      %p76 = pneg %p45
    $region27: #{tpu_custom_call.1} parent=1 // pred_check_branch
      %78 = sbr.rel (%p76) target = $region29
    $region28: #{tpu_custom_call.1} parent=1 // pred_region
      %v79 = vld [vmem:[#allocation2] sm:$0x3]
      %v80 = vld [vmem:[%s2] sm:$0x1]
      %v82 = vperm.slane %v80, 0
      %v84 = vadd.f32 %v79, %v82
      %85 = vst.msk [vmem:[#allocation8] sm:$0x3] %vm74, %v84
    $region29: #{tpu_custom_call.1} parent=1 // pred_fallthru
      _
    // Predicated region
    $region30: #{tpu_custom_call.1} parent=1 // pred_check
      _
    $region31: #{tpu_custom_call.1} parent=1 // pred_check_branch
      %87 = sbr.rel (0) target = $region33
    $region32: #{tpu_custom_call.1} parent=1 // pred_region
      %89 = vsyncadd [#allocation5], 0
      %s91 = sshll.u32 [#allocation8], 4
      %s92 = int_to_ptr.vmem [resolvable:$true] %s91
      %s93 = sshll.u32 %s3, 4
      %s94 = int_to_ptr.hbm [resolvable:$true] %s93
      %96 = dma.vmem_to_hbm [thread:$0]  %s92, 32, %s94, [#allocation5]
    $region33: #{tpu_custom_call.1} parent=1 // pred_fallthru
      _
    // Predicated region
    $region34: #{tpu_custom_call.1} parent=1 // pred_check
      _
    $region35: #{tpu_custom_call.1} parent=1 // pred_check_branch
      %98 = sbr.rel (0) target = $region37
    $region36: #{tpu_custom_call.1} parent=1 // pred_region
      %100 = dma.done [#allocation5], 32
    $region37: #{tpu_custom_call.1} parent=1 // pred_fallthru
      _
    %101 = vsyncpa [#allocation4], 1
    %102 = vsyncpa [#allocation7], 1
    %103 = vsyncpa [#allocation5], 1

</llo_original>
